<compile_context>
chip_gen: v7x
topology: tpu7x:2x2x1
jax: 0.10.0
libtpu: 0.0.40
codegen_flags: <defaults>
</compile_context>

<pallas_src>
import jax
import jax.numpy as jnp
import numpy as np
from jax.experimental import pallas as pl
from jax.experimental.pallas import tpu as pltpu


def vtb_kernel(xT_ref, w1f_ref, b1f_ref, woT_ref, wp_ref, outT_ref):
    """One batch tile in transposed (feature, batch) layout.

    xT_ref  : (E, TB)      input tile, batch on the lane axis
    w1f_ref : (NH*HD, E)   all per-head FC weights, flattened & transposed
    b1f_ref : (NH*HD, 1)   all per-head FC biases (column)
    woT_ref : (E, HD)      output projection, transposed
    wp_ref  : (NH,)        learnable pooling weights (SMEM scalars)
    outT_ref: (E, TB)      output tile
    """
    num_heads = wp_ref.shape[0]
    heads_dim = woT_ref.shape[1]

    xT = xT_ref[...]                                               # (E, TB)

    # ---- all per-head FC blocks in one MXU matmul (+ bias + ReLU) ----------
    embT = jnp.dot(w1f_ref[...], xT, preferred_element_type=jnp.float32)
    embT = jnp.maximum(embT + b1f_ref[...], 0.0)                   # (NH*HD, TB) f32

    # Static, sublane-aligned per-head views (HD is a multiple of 8).
    heads = [embT[h * heads_dim:(h + 1) * heads_dim, :] for h in range(num_heads)]

    # ---- scaled dot-product self attention over the head axis --------------
    # Unrolled VPU multiplies + XLU sublane reductions; batch-parallel on lanes.
    scale = 1.0 / (float(heads_dim) ** 0.5)
    scores = [[jnp.sum(heads[q] * heads[k], axis=0, keepdims=True) * scale
               for k in range(num_heads)] for q in range(num_heads)]   # each (1, TB)

    ctx = []
    for q in range(num_heads):
        row_max = scores[q][0]
        for k in range(1, num_heads):
            row_max = jnp.maximum(row_max, scores[q][k])
        p = [jnp.exp(scores[q][k] - row_max) for k in range(num_heads)]
        denom = p[0]
        for k in range(1, num_heads):
            denom = denom + p[k]
        inv = pl.reciprocal(denom, approx=True)                    # EUP slot, (1, TB)
        c = (p[0] * inv) * heads[0]
        for k in range(1, num_heads):
            c = c + (p[k] * inv) * heads[k]
        ctx.append(c)                                              # (HD, TB)

    # ---- learnable sequence pooling folded BEFORE the projection -----------
    pooled = ctx[0] * wp_ref[0]
    for q in range(1, num_heads):
        pooled = pooled + ctx[q] * wp_ref[q]                       # (HD, TB)

    # ---- single output projection matmul + residual -------------------------
    projT = jnp.dot(woT_ref[...], pooled, preferred_element_type=jnp.float32)  # (E, TB)
    outT_ref[...] = (xT.astype(jnp.float32) + projT).astype(outT_ref.dtype)


def vector_transformer_block(x, w1, b1, wo, wpool, *, batch_tile=128):
    """x: (B, E); w1: (NH, E, HD); b1: (NH, HD); wo: (HD, E); wpool: (NH,)."""
    B, E = x.shape
    NH, _, HD = w1.shape
    assert B % batch_tile == 0, (B, batch_tile)

    # Wrapper-side layout plumbing (lane-dense kernel layout).
    xT = x.T                                                    # (E, B)
    w1f = jnp.transpose(w1, (0, 2, 1)).reshape(NH * HD, E)      # (NH*HD, E)
    b1f = b1.reshape(NH * HD, 1)                                # (NH*HD, 1)
    woT = wo.T                                                  # (E, HD)

    grid = (B // batch_tile,)   # >= 2 parallel steps so v7x's 2 TCs both work

    outT = pl.pallas_call(
        vtb_kernel,
        out_shape=jax.ShapeDtypeStruct((E, B), x.dtype),
        grid=grid,
        in_specs=[
            pl.BlockSpec((E, batch_tile), lambda i: (0, i)),        # x^T tiled over batch (lanes)
            pl.BlockSpec((NH * HD, E), lambda i: (0, 0)),           # fused FC weights
            pl.BlockSpec((NH * HD, 1), lambda i: (0, 0)),           # fused FC biases
            pl.BlockSpec((E, HD), lambda i: (0, 0)),                # output projection^T
            pl.BlockSpec(memory_space=pltpu.MemorySpace.SMEM),      # pooling weights (scalars)
        ],
        out_specs=pl.BlockSpec((E, batch_tile), lambda i: (0, i)),
        compiler_params=pltpu.CompilerParams(
            dimension_semantics=("parallel",),
            vmem_limit_bytes=32 * 1024 * 1024,
        ),
    )(xT, w1f, b1f, woT, wpool)
    return outT.T


def vtb_reference(x, w1, b1, wo, wpool):
    """Pure-JAX reference of the same forward pass."""
    emb = jnp.maximum(jnp.einsum('be,hed->bhd', x, w1) + b1[None], 0.0)
    scale = 1.0 / jnp.sqrt(jnp.float32(emb.shape[-1]))
    s = jnp.einsum('bqd,bkd->bqk', emb, emb) * scale
    a = jax.nn.softmax(s, axis=-1)
    ctx = jnp.einsum('bqk,bkd->bqd', a, emb)
    proj = jnp.einsum('bhd,de->bhe', ctx, wo)
    pooled = jnp.einsum('bhe,h->be', proj, wpool)
    return x + pooled


if __name__ == "__main__":
    # Small, module-consistent shapes (two 128-row batch tiles).
    B, E, HD, NH = 256, 32, 16, 4   # batch, embedding_dim, heads_dim, num_heads

    key = jax.random.PRNGKey(0)
    kx, kw1, kb1, kwo, kwp = jax.random.split(key, 5)

    x = jax.random.normal(kx, (B, E), dtype=jnp.float32)

    # Deterministic synthetic parameters (shapes from the module's __init__).
    w1 = 0.1 * jax.random.normal(kw1, (NH, E, HD), dtype=jnp.float32)   # per-head nn.Linear(E, Hd).weight.T
    b1 = 0.1 * jax.random.normal(kb1, (NH, HD), dtype=jnp.float32)      # per-head nn.Linear(E, Hd).bias
    wo = 0.1 * jax.random.normal(kwo, (HD, E), dtype=jnp.float32)       # nn.Linear(Hd, E, bias=False).weight.T
    wpool = 0.5 * jax.random.normal(kwp, (NH,), dtype=jnp.float32)      # LearnableSequencePooling weights

    out = jax.block_until_ready(vector_transformer_block(x, w1, b1, wo, wpool, batch_tile=128))
    ref = jax.block_until_ready(vtb_reference(x, w1, b1, wo, wpool))

    # Slightly loose tolerance: approximate EUP reciprocal in the softmax.
    np.testing.assert_allclose(np.asarray(out), np.asarray(ref), rtol=2e-3, atol=2e-3)

    print("KERNEL_OK")
</pallas_src>

<mosaic_0001>
module attributes {stable_mosaic.version = 11 : i64} {
  func.func @vtb_kernel(%arg0: i32, %arg1: memref<32x128xf32, #tpu.memory_space<vmem>>, %arg2: memref<64x32xf32, #tpu.memory_space<vmem>>, %arg3: memref<64x1xf32, #tpu.memory_space<vmem>>, %arg4: memref<32x16xf32, #tpu.memory_space<vmem>>, %arg5: memref<4xf32, #tpu.memory_space<smem>>, %arg6: memref<32x128xf32, #tpu.memory_space<vmem>>) attributes {dimension_semantics = [#tpu.dimension_semantics<parallel>], iteration_bounds = array<i64: 2>, scalar_prefetch = 0 : i64, scratch_operands = 0 : i64, tpu.core_type = #tpu.core_type<tc>, window_params = [{transform_indices = @transform_0, window_bounds = array<i64: 32, 128>}, {pipeline_mode = #tpu.pipeline_mode<synchronous>, transform_indices = @transform_1, window_bounds = array<i64: 64, 32>}, {pipeline_mode = #tpu.pipeline_mode<synchronous>, transform_indices = @transform_2, window_bounds = array<i64: 64, 1>}, {pipeline_mode = #tpu.pipeline_mode<synchronous>, transform_indices = @transform_3, window_bounds = array<i64: 32, 16>}, {transform_indices = @transform_4, window_bounds = array<i64: 4>}, {transform_indices = @transform_5, window_bounds = array<i64: 32, 128>}]} {
    %c0 = arith.constant 0 : index
    %c0_0 = arith.constant 0 : index
    %0 = vector.load %arg1[%c0, %c0_0] : memref<32x128xf32, #tpu.memory_space<vmem>>, vector<32x128xf32>
    %c0_1 = arith.constant 0 : index
    %c0_2 = arith.constant 0 : index
    %1 = vector.load %arg2[%c0_1, %c0_2] : memref<64x32xf32, #tpu.memory_space<vmem>>, vector<64x32xf32>
    %cst = arith.constant dense<0.000000e+00> : vector<64x128xf32>
    %2 = tpu.matmul %1, %0, %cst {dimension_numbers = #tpu.dot_dimension_numbers<[1], [0], [0], [1], [0, 0, 1, 1], [], []>} : vector<64x32xf32>, vector<32x128xf32>, vector<64x128xf32> -> vector<64x128xf32>
    %c0_3 = arith.constant 0 : index
    %c0_4 = arith.constant 0 : index
    %3 = vector.load %arg3[%c0_3, %c0_4] : memref<64x1xf32, #tpu.memory_space<vmem>>, vector<64x1xf32>
    %4 = vector.broadcast %3 : vector<64x1xf32> to vector<64x128xf32>
    %5 = arith.addf %2, %4 : vector<64x128xf32>
    %cst_5 = arith.constant 0.000000e+00 : f32
    %6 = vector.broadcast %cst_5 : f32 to vector<64x128xf32>
    %7 = arith.maximumf %5, %6 : vector<64x128xf32>
    %8 = vector.extract_strided_slice %7 {offsets = [0, 0], sizes = [16, 128], strides = [1, 1]} : vector<64x128xf32> to vector<16x128xf32>
    %9 = vector.extract_strided_slice %7 {offsets = [16, 0], sizes = [16, 128], strides = [1, 1]} : vector<64x128xf32> to vector<16x128xf32>
    %10 = vector.extract_strided_slice %7 {offsets = [32, 0], sizes = [16, 128], strides = [1, 1]} : vector<64x128xf32> to vector<16x128xf32>
    %11 = vector.extract_strided_slice %7 {offsets = [48, 0], sizes = [16, 128], strides = [1, 1]} : vector<64x128xf32> to vector<16x128xf32>
    %12 = arith.mulf %8, %8 : vector<16x128xf32>
    %cst_6 = arith.constant dense<0.000000e+00> : vector<128xf32>
    %13 = vector.multi_reduction <add>, %12, %cst_6 [0] : vector<16x128xf32> to vector<128xf32>
    %14 = vector.shape_cast %13 : vector<128xf32> to vector<1x128xf32>
    %cst_7 = arith.constant 2.500000e-01 : f32
    %15 = vector.broadcast %cst_7 : f32 to vector<1x128xf32>
    %16 = arith.mulf %14, %15 : vector<1x128xf32>
    %17 = arith.mulf %8, %9 : vector<16x128xf32>
    %cst_8 = arith.constant dense<0.000000e+00> : vector<128xf32>
    %18 = vector.multi_reduction <add>, %17, %cst_8 [0] : vector<16x128xf32> to vector<128xf32>
    %19 = vector.shape_cast %18 : vector<128xf32> to vector<1x128xf32>
    %cst_9 = arith.constant 2.500000e-01 : f32
    %20 = vector.broadcast %cst_9 : f32 to vector<1x128xf32>
    %21 = arith.mulf %19, %20 : vector<1x128xf32>
    %22 = arith.mulf %8, %10 : vector<16x128xf32>
    %cst_10 = arith.constant dense<0.000000e+00> : vector<128xf32>
    %23 = vector.multi_reduction <add>, %22, %cst_10 [0] : vector<16x128xf32> to vector<128xf32>
    %24 = vector.shape_cast %23 : vector<128xf32> to vector<1x128xf32>
    %cst_11 = arith.constant 2.500000e-01 : f32
    %25 = vector.broadcast %cst_11 : f32 to vector<1x128xf32>
    %26 = arith.mulf %24, %25 : vector<1x128xf32>
    %27 = arith.mulf %8, %11 : vector<16x128xf32>
    %cst_12 = arith.constant dense<0.000000e+00> : vector<128xf32>
    %28 = vector.multi_reduction <add>, %27, %cst_12 [0] : vector<16x128xf32> to vector<128xf32>
    %29 = vector.shape_cast %28 : vector<128xf32> to vector<1x128xf32>
    %cst_13 = arith.constant 2.500000e-01 : f32
    %30 = vector.broadcast %cst_13 : f32 to vector<1x128xf32>
    %31 = arith.mulf %29, %30 : vector<1x128xf32>
    %32 = arith.mulf %9, %8 : vector<16x128xf32>
    %cst_14 = arith.constant dense<0.000000e+00> : vector<128xf32>
    %33 = vector.multi_reduction <add>, %32, %cst_14 [0] : vector<16x128xf32> to vector<128xf32>
    %34 = vector.shape_cast %33 : vector<128xf32> to vector<1x128xf32>
    %cst_15 = arith.constant 2.500000e-01 : f32
    %35 = vector.broadcast %cst_15 : f32 to vector<1x128xf32>
    %36 = arith.mulf %34, %35 : vector<1x128xf32>
    %37 = arith.mulf %9, %9 : vector<16x128xf32>
    %cst_16 = arith.constant dense<0.000000e+00> : vector<128xf32>
    %38 = vector.multi_reduction <add>, %37, %cst_16 [0] : vector<16x128xf32> to vector<128xf32>
    %39 = vector.shape_cast %38 : vector<128xf32> to vector<1x128xf32>
    %cst_17 = arith.constant 2.500000e-01 : f32
    %40 = vector.broadcast %cst_17 : f32 to vector<1x128xf32>
    %41 = arith.mulf %39, %40 : vector<1x128xf32>
    %42 = arith.mulf %9, %10 : vector<16x128xf32>
    %cst_18 = arith.constant dense<0.000000e+00> : vector<128xf32>
    %43 = vector.multi_reduction <add>, %42, %cst_18 [0] : vector<16x128xf32> to vector<128xf32>
    %44 = vector.shape_cast %43 : vector<128xf32> to vector<1x128xf32>
    %cst_19 = arith.constant 2.500000e-01 : f32
    %45 = vector.broadcast %cst_19 : f32 to vector<1x128xf32>
    %46 = arith.mulf %44, %45 : vector<1x128xf32>
    %47 = arith.mulf %9, %11 : vector<16x128xf32>
    %cst_20 = arith.constant dense<0.000000e+00> : vector<128xf32>
    %48 = vector.multi_reduction <add>, %47, %cst_20 [0] : vector<16x128xf32> to vector<128xf32>
    %49 = vector.shape_cast %48 : vector<128xf32> to vector<1x128xf32>
    %cst_21 = arith.constant 2.500000e-01 : f32
    %50 = vector.broadcast %cst_21 : f32 to vector<1x128xf32>
    %51 = arith.mulf %49, %50 : vector<1x128xf32>
    %52 = arith.mulf %10, %8 : vector<16x128xf32>
    %cst_22 = arith.constant dense<0.000000e+00> : vector<128xf32>
    %53 = vector.multi_reduction <add>, %52, %cst_22 [0] : vector<16x128xf32> to vector<128xf32>
    %54 = vector.shape_cast %53 : vector<128xf32> to vector<1x128xf32>
    %cst_23 = arith.constant 2.500000e-01 : f32
    %55 = vector.broadcast %cst_23 : f32 to vector<1x128xf32>
    %56 = arith.mulf %54, %55 : vector<1x128xf32>
    %57 = arith.mulf %10, %9 : vector<16x128xf32>
    %cst_24 = arith.constant dense<0.000000e+00> : vector<128xf32>
    %58 = vector.multi_reduction <add>, %57, %cst_24 [0] : vector<16x128xf32> to vector<128xf32>
    %59 = vector.shape_cast %58 : vector<128xf32> to vector<1x128xf32>
    %cst_25 = arith.constant 2.500000e-01 : f32
    %60 = vector.broadcast %cst_25 : f32 to vector<1x128xf32>
    %61 = arith.mulf %59, %60 : vector<1x128xf32>
    %62 = arith.mulf %10, %10 : vector<16x128xf32>
    %cst_26 = arith.constant dense<0.000000e+00> : vector<128xf32>
    %63 = vector.multi_reduction <add>, %62, %cst_26 [0] : vector<16x128xf32> to vector<128xf32>
    %64 = vector.shape_cast %63 : vector<128xf32> to vector<1x128xf32>
    %cst_27 = arith.constant 2.500000e-01 : f32
    %65 = vector.broadcast %cst_27 : f32 to vector<1x128xf32>
    %66 = arith.mulf %64, %65 : vector<1x128xf32>
    %67 = arith.mulf %10, %11 : vector<16x128xf32>
    %cst_28 = arith.constant dense<0.000000e+00> : vector<128xf32>
    %68 = vector.multi_reduction <add>, %67, %cst_28 [0] : vector<16x128xf32> to vector<128xf32>
    %69 = vector.shape_cast %68 : vector<128xf32> to vector<1x128xf32>
    %cst_29 = arith.constant 2.500000e-01 : f32
    %70 = vector.broadcast %cst_29 : f32 to vector<1x128xf32>
    %71 = arith.mulf %69, %70 : vector<1x128xf32>
    %72 = arith.mulf %11, %8 : vector<16x128xf32>
    %cst_30 = arith.constant dense<0.000000e+00> : vector<128xf32>
    %73 = vector.multi_reduction <add>, %72, %cst_30 [0] : vector<16x128xf32> to vector<128xf32>
    %74 = vector.shape_cast %73 : vector<128xf32> to vector<1x128xf32>
    %cst_31 = arith.constant 2.500000e-01 : f32
    %75 = vector.broadcast %cst_31 : f32 to vector<1x128xf32>
    %76 = arith.mulf %74, %75 : vector<1x128xf32>
    %77 = arith.mulf %11, %9 : vector<16x128xf32>
    %cst_32 = arith.constant dense<0.000000e+00> : vector<128xf32>
    %78 = vector.multi_reduction <add>, %77, %cst_32 [0] : vector<16x128xf32> to vector<128xf32>
    %79 = vector.shape_cast %78 : vector<128xf32> to vector<1x128xf32>
    %cst_33 = arith.constant 2.500000e-01 : f32
    %80 = vector.broadcast %cst_33 : f32 to vector<1x128xf32>
    %81 = arith.mulf %79, %80 : vector<1x128xf32>
    %82 = arith.mulf %11, %10 : vector<16x128xf32>
    %cst_34 = arith.constant dense<0.000000e+00> : vector<128xf32>
    %83 = vector.multi_reduction <add>, %82, %cst_34 [0] : vector<16x128xf32> to vector<128xf32>
    %84 = vector.shape_cast %83 : vector<128xf32> to vector<1x128xf32>
    %cst_35 = arith.constant 2.500000e-01 : f32
    %85 = vector.broadcast %cst_35 : f32 to vector<1x128xf32>
    %86 = arith.mulf %84, %85 : vector<1x128xf32>
    %87 = arith.mulf %11, %11 : vector<16x128xf32>
    %cst_36 = arith.constant dense<0.000000e+00> : vector<128xf32>
    %88 = vector.multi_reduction <add>, %87, %cst_36 [0] : vector<16x128xf32> to vector<128xf32>
    %89 = vector.shape_cast %88 : vector<128xf32> to vector<1x128xf32>
    %cst_37 = arith.constant 2.500000e-01 : f32
    %90 = vector.broadcast %cst_37 : f32 to vector<1x128xf32>
    %91 = arith.mulf %89, %90 : vector<1x128xf32>
    %92 = arith.maximumf %16, %21 : vector<1x128xf32>
    %93 = arith.maximumf %92, %26 : vector<1x128xf32>
    %94 = arith.maximumf %93, %31 : vector<1x128xf32>
    %95 = arith.subf %16, %94 : vector<1x128xf32>
    %96 = math.exp %95 : vector<1x128xf32>
    %97 = arith.subf %21, %94 : vector<1x128xf32>
    %98 = math.exp %97 : vector<1x128xf32>
    %99 = arith.subf %26, %94 : vector<1x128xf32>
    %100 = math.exp %99 : vector<1x128xf32>
    %101 = arith.subf %31, %94 : vector<1x128xf32>
    %102 = math.exp %101 : vector<1x128xf32>
    %103 = arith.addf %96, %98 : vector<1x128xf32>
    %104 = arith.addf %103, %100 : vector<1x128xf32>
    %105 = arith.addf %104, %102 : vector<1x128xf32>
    %106 = tpu.reciprocal %105 {approx = true} : vector<1x128xf32> -> vector<1x128xf32>
    %107 = arith.mulf %96, %106 : vector<1x128xf32>
    %108 = vector.broadcast %107 : vector<1x128xf32> to vector<16x128xf32>
    %109 = arith.mulf %108, %8 : vector<16x128xf32>
    %110 = arith.mulf %98, %106 : vector<1x128xf32>
    %111 = vector.broadcast %110 : vector<1x128xf32> to vector<16x128xf32>
    %112 = arith.mulf %111, %9 : vector<16x128xf32>
    %113 = arith.addf %109, %112 : vector<16x128xf32>
    %114 = arith.mulf %100, %106 : vector<1x128xf32>
    %115 = vector.broadcast %114 : vector<1x128xf32> to vector<16x128xf32>
    %116 = arith.mulf %115, %10 : vector<16x128xf32>
    %117 = arith.addf %113, %116 : vector<16x128xf32>
    %118 = arith.mulf %102, %106 : vector<1x128xf32>
    %119 = vector.broadcast %118 : vector<1x128xf32> to vector<16x128xf32>
    %120 = arith.mulf %119, %11 : vector<16x128xf32>
    %121 = arith.addf %117, %120 : vector<16x128xf32>
    %122 = arith.maximumf %36, %41 : vector<1x128xf32>
    %123 = arith.maximumf %122, %46 : vector<1x128xf32>
    %124 = arith.maximumf %123, %51 : vector<1x128xf32>
    %125 = arith.subf %36, %124 : vector<1x128xf32>
    %126 = math.exp %125 : vector<1x128xf32>
    %127 = arith.subf %41, %124 : vector<1x128xf32>
    %128 = math.exp %127 : vector<1x128xf32>
    %129 = arith.subf %46, %124 : vector<1x128xf32>
    %130 = math.exp %129 : vector<1x128xf32>
    %131 = arith.subf %51, %124 : vector<1x128xf32>
    %132 = math.exp %131 : vector<1x128xf32>
    %133 = arith.addf %126, %128 : vector<1x128xf32>
    %134 = arith.addf %133, %130 : vector<1x128xf32>
    %135 = arith.addf %134, %132 : vector<1x128xf32>
    %136 = tpu.reciprocal %135 {approx = true} : vector<1x128xf32> -> vector<1x128xf32>
    %137 = arith.mulf %126, %136 : vector<1x128xf32>
    %138 = vector.broadcast %137 : vector<1x128xf32> to vector<16x128xf32>
    %139 = arith.mulf %138, %8 : vector<16x128xf32>
    %140 = arith.mulf %128, %136 : vector<1x128xf32>
    %141 = vector.broadcast %140 : vector<1x128xf32> to vector<16x128xf32>
    %142 = arith.mulf %141, %9 : vector<16x128xf32>
    %143 = arith.addf %139, %142 : vector<16x128xf32>
    %144 = arith.mulf %130, %136 : vector<1x128xf32>
    %145 = vector.broadcast %144 : vector<1x128xf32> to vector<16x128xf32>
    %146 = arith.mulf %145, %10 : vector<16x128xf32>
    %147 = arith.addf %143, %146 : vector<16x128xf32>
    %148 = arith.mulf %132, %136 : vector<1x128xf32>
    %149 = vector.broadcast %148 : vector<1x128xf32> to vector<16x128xf32>
    %150 = arith.mulf %149, %11 : vector<16x128xf32>
    %151 = arith.addf %147, %150 : vector<16x128xf32>
    %152 = arith.maximumf %56, %61 : vector<1x128xf32>
    %153 = arith.maximumf %152, %66 : vector<1x128xf32>
    %154 = arith.maximumf %153, %71 : vector<1x128xf32>
    %155 = arith.subf %56, %154 : vector<1x128xf32>
    %156 = math.exp %155 : vector<1x128xf32>
    %157 = arith.subf %61, %154 : vector<1x128xf32>
    %158 = math.exp %157 : vector<1x128xf32>
    %159 = arith.subf %66, %154 : vector<1x128xf32>
    %160 = math.exp %159 : vector<1x128xf32>
    %161 = arith.subf %71, %154 : vector<1x128xf32>
    %162 = math.exp %161 : vector<1x128xf32>
    %163 = arith.addf %156, %158 : vector<1x128xf32>
    %164 = arith.addf %163, %160 : vector<1x128xf32>
    %165 = arith.addf %164, %162 : vector<1x128xf32>
    %166 = tpu.reciprocal %165 {approx = true} : vector<1x128xf32> -> vector<1x128xf32>
    %167 = arith.mulf %156, %166 : vector<1x128xf32>
    %168 = vector.broadcast %167 : vector<1x128xf32> to vector<16x128xf32>
    %169 = arith.mulf %168, %8 : vector<16x128xf32>
    %170 = arith.mulf %158, %166 : vector<1x128xf32>
    %171 = vector.broadcast %170 : vector<1x128xf32> to vector<16x128xf32>
    %172 = arith.mulf %171, %9 : vector<16x128xf32>
    %173 = arith.addf %169, %172 : vector<16x128xf32>
    %174 = arith.mulf %160, %166 : vector<1x128xf32>
    %175 = vector.broadcast %174 : vector<1x128xf32> to vector<16x128xf32>
    %176 = arith.mulf %175, %10 : vector<16x128xf32>
    %177 = arith.addf %173, %176 : vector<16x128xf32>
    %178 = arith.mulf %162, %166 : vector<1x128xf32>
    %179 = vector.broadcast %178 : vector<1x128xf32> to vector<16x128xf32>
    %180 = arith.mulf %179, %11 : vector<16x128xf32>
    %181 = arith.addf %177, %180 : vector<16x128xf32>
    %182 = arith.maximumf %76, %81 : vector<1x128xf32>
    %183 = arith.maximumf %182, %86 : vector<1x128xf32>
    %184 = arith.maximumf %183, %91 : vector<1x128xf32>
    %185 = arith.subf %76, %184 : vector<1x128xf32>
    %186 = math.exp %185 : vector<1x128xf32>
    %187 = arith.subf %81, %184 : vector<1x128xf32>
    %188 = math.exp %187 : vector<1x128xf32>
    %189 = arith.subf %86, %184 : vector<1x128xf32>
    %190 = math.exp %189 : vector<1x128xf32>
    %191 = arith.subf %91, %184 : vector<1x128xf32>
    %192 = math.exp %191 : vector<1x128xf32>
    %193 = arith.addf %186, %188 : vector<1x128xf32>
    %194 = arith.addf %193, %190 : vector<1x128xf32>
    %195 = arith.addf %194, %192 : vector<1x128xf32>
    %196 = tpu.reciprocal %195 {approx = true} : vector<1x128xf32> -> vector<1x128xf32>
    %197 = arith.mulf %186, %196 : vector<1x128xf32>
    %198 = vector.broadcast %197 : vector<1x128xf32> to vector<16x128xf32>
    %199 = arith.mulf %198, %8 : vector<16x128xf32>
    %200 = arith.mulf %188, %196 : vector<1x128xf32>
    %201 = vector.broadcast %200 : vector<1x128xf32> to vector<16x128xf32>
    %202 = arith.mulf %201, %9 : vector<16x128xf32>
    %203 = arith.addf %199, %202 : vector<16x128xf32>
    %204 = arith.mulf %190, %196 : vector<1x128xf32>
    %205 = vector.broadcast %204 : vector<1x128xf32> to vector<16x128xf32>
    %206 = arith.mulf %205, %10 : vector<16x128xf32>
    %207 = arith.addf %203, %206 : vector<16x128xf32>
    %208 = arith.mulf %192, %196 : vector<1x128xf32>
    %209 = vector.broadcast %208 : vector<1x128xf32> to vector<16x128xf32>
    %210 = arith.mulf %209, %11 : vector<16x128xf32>
    %211 = arith.addf %207, %210 : vector<16x128xf32>
    %c0_38 = arith.constant 0 : index
    %212 = memref.load %arg5[%c0_38] : memref<4xf32, #tpu.memory_space<smem>>
    %213 = vector.broadcast %212 : f32 to vector<16x128xf32>
    %214 = arith.mulf %121, %213 : vector<16x128xf32>
    %c1 = arith.constant 1 : index
    %215 = memref.load %arg5[%c1] : memref<4xf32, #tpu.memory_space<smem>>
    %216 = vector.broadcast %215 : f32 to vector<16x128xf32>
    %217 = arith.mulf %151, %216 : vector<16x128xf32>
    %218 = arith.addf %214, %217 : vector<16x128xf32>
    %c2 = arith.constant 2 : index
    %219 = memref.load %arg5[%c2] : memref<4xf32, #tpu.memory_space<smem>>
    %220 = vector.broadcast %219 : f32 to vector<16x128xf32>
    %221 = arith.mulf %181, %220 : vector<16x128xf32>
    %222 = arith.addf %218, %221 : vector<16x128xf32>
    %c3 = arith.constant 3 : index
    %223 = memref.load %arg5[%c3] : memref<4xf32, #tpu.memory_space<smem>>
    %224 = vector.broadcast %223 : f32 to vector<16x128xf32>
    %225 = arith.mulf %211, %224 : vector<16x128xf32>
    %226 = arith.addf %222, %225 : vector<16x128xf32>
    %c0_39 = arith.constant 0 : index
    %c0_40 = arith.constant 0 : index
    %227 = vector.load %arg4[%c0_39, %c0_40] : memref<32x16xf32, #tpu.memory_space<vmem>>, vector<32x16xf32>
    %cst_41 = arith.constant dense<0.000000e+00> : vector<32x128xf32>
    %228 = tpu.matmul %227, %226, %cst_41 {dimension_numbers = #tpu.dot_dimension_numbers<[1], [0], [0], [1], [0, 0, 1, 1], [], []>} : vector<32x16xf32>, vector<16x128xf32>, vector<32x128xf32> -> vector<32x128xf32>
    %229 = arith.addf %0, %228 : vector<32x128xf32>
    %c0_42 = arith.constant 0 : index
    %c0_43 = arith.constant 0 : index
    %230 = vector.load %arg6[%c0_42, %c0_43] : memref<32x128xf32, #tpu.memory_space<vmem>>, vector<32x128xf32>
    tpu.vector_store %arg6[%c0_42, %c0_43], %229 {strides = array<i32>} : memref<32x128xf32, #tpu.memory_space<vmem>>, vector<32x128xf32>,
    return
  }
  func.func @transform_0(%arg0: i32) -> (i32, i32) {
    %c0_i32 = arith.constant 0 : i32
    %c0_i32_0 = arith.constant 0 : i32
    return %c0_i32, %arg0 : i32, i32
  }
  func.func @transform_1(%arg0: i32) -> (i32, i32) {
    %c0_i32 = arith.constant 0 : i32
    %c0_i32_0 = arith.constant 0 : i32
    %c0_i32_1 = arith.constant 0 : i32
    return %c0_i32, %c0_i32_0 : i32, i32
  }
  func.func @transform_2(%arg0: i32) -> (i32, i32) {
    %c0_i32 = arith.constant 0 : i32
    %c0_i32_0 = arith.constant 0 : i32
    %c0_i32_1 = arith.constant 0 : i32
    return %c0_i32, %c0_i32_0 : i32, i32
  }
  func.func @transform_3(%arg0: i32) -> (i32, i32) {
    %c0_i32 = arith.constant 0 : i32
    %c0_i32_0 = arith.constant 0 : i32
    %c0_i32_1 = arith.constant 0 : i32
    return %c0_i32, %c0_i32_0 : i32, i32
  }
  func.func @transform_4(%arg0: i32) -> i32 {
    %c0_i32 = arith.constant 0 : i32
    %c0_i32_0 = arith.constant 0 : i32
    return %c0_i32 : i32
  }
  func.func @transform_5(%arg0: i32) -> (i32, i32) {
    %c0_i32 = arith.constant 0 : i32
    %c0_i32_0 = arith.constant 0 : i32
    return %c0_i32, %arg0 : i32, i32
  }
}

</mosaic_0001>

<llo_original>
// kernel: tpu_custom_call.1
$region0: #{tpu_custom_call.1}
  #allocation0 [shape = 'u32[]', space=smem, size = 0x4, offset = 0x4, fixed_abs, tag = 'smem constant byte address 0x4 - core index']
  #allocation1 [shape = 'u32[144,128]{1,0:T(1,128)}', space=vmem, size = 0x12000, scoped, tag = 'internal scratch']
  %s0 = inlined_call_operand.vmem [shape: f32[32,256], index: 0, kind: input, shape index: {}]
  %s1 = inlined_call_operand.vmem [shape: f32[64,32], index: 1, kind: input, shape index: {}]
  %s2 = inlined_call_operand.vmem [shape: f32[64,1], index: 2, kind: input, shape index: {}]
  %s3 = inlined_call_operand.vmem [shape: f32[32,16], index: 3, kind: input, shape index: {}]
  %s4 = inlined_call_operand.vmem [shape: f32[4], index: 4, kind: input, shape index: {}]
  %s5 = inlined_call_operand.hbm [shape: f32[32,256], index: 5, kind: output, shape index: {}]
  %s6 = sld [smem:[#allocation0]]
  $region95: #{tpu_custom_call.1} parent=0
    _
  %s8 = ssub.s32 1, %s6
  %s9 = scalar_select 0, %s8, %s6
  $region1: #{tpu_custom_call.1} parent=0
    #allocation2 [shape = 'u8[32768]{0}', space=vmem, size = 0x8000, scoped, tag = 'input window, operand 0']
    #allocation3 [shape = 'u8[512]{0}', space=smem, size = 0x200, scoped, tag = 'input window, operand 4, single buffered']
    #allocation4 [shape = 's32[2]{0}', space=sflag, size = 0x8, scoped, tag = 'scoped memory for tpu_custom_call.1']
    #allocation5 [shape = 's32[2]{0}', space=sflag, size = 0x8, scoped, tag = 'scoped memory for tpu_custom_call.1']
    #allocation6 [shape = 'u8[32768]{0}', space=vmem, size = 0x8000, scoped, tag = 'output window, operand 0']
    %10 = vsyncpa [#allocation5], 0
    %11 = vsyncpa [#allocation4], 0
    %s12 = scalar_lea.sflag [#allocation4], 1
    %13 = vsyncpa %s12, 0
    loop: start=0, step=1, limit=4
    $region2: #{tpu_custom_call.1} parent=1 // loop_pre_header
      _
    $region3: #{tpu_custom_call.1} parent=1 // loop_header
      %s15 = sphi 0, %s19
      %p16 = scmp.ge.s32.totalorder %s15, 4
      %s25 = sphi 0, %s27
      %s28 = sphi 0, %s25
      %s29 = sphi 0, %s28
      %s45 = sphi 0, %s29
      %s49 = sphi 0, %s49
      %s51 = sphi 0, %s49
      %s52 = sphi 0, %s51
      %s66 = sphi 0, %s52
      %s70 = sphi 0, %s70
      %s72 = sphi 0, %s70
      %s73 = sphi 0, %s72
      %s87 = sphi 0, %s73
      %s91 = sphi 0, %s91
      %s93 = sphi 0, %s91
      %s94 = sphi 0, %s93
      %s108 = sphi 0, %s94
      %s112 = sphi 0, %s112
      %s114 = sphi 0, %s112
      %s115 = sphi 0, %s114
      %s129 = sphi 0, %s115
      %s135 = sphi 0, %s137
      %s138 = sphi 0, %s135
      %s139 = sphi 0, %s138
      %s155 = sphi 0, %s139
    $region4: #{tpu_custom_call.1} parent=1 // loop_header_branch
      %18 = sbr.rel (%p16) target = $region8
    $region5: #{tpu_custom_call.1} parent=1 // loop_body
      %s20 = ssub.s32 %s15, 1
      %s21 = ssub.s32 %s15, 2
      %s22 = sadd.s32 %s15, 1
      %s23 = ssub.s32 %s15, %s22
      %p24 = scmp.eq.s32.totalorder %s23, 0
      %s26 = sadd.s32 %s25, 1
      %s27 = scalar_select %p24, %s25, %s26
      %p30 = pneg %p24
      %p31 = scmp.eq.s32.totalorder %s15, 1
      %p32 = por %p30, %p31
      %p33 = scmp.ne.s32.totalorder %s25, %s28
      %p34 = scmp.eq.s32.totalorder %s15, 0
      %p35 = por %p33, %p34
      %p36 = scmp.ne.s32.totalorder %s25, %s28
      %p37 = scmp.eq.s32.totalorder %s20, 1
      %p38 = por %p36, %p37
      %p39 = scmp.ne.s32.totalorder %s28, %s29
      %p40 = scmp.eq.s32.totalorder %s20, 0
      %p41 = por %p39, %p40
      %p42 = scmp.ne.s32.totalorder %s28, %s29
      %p43 = scmp.eq.s32.totalorder %s21, 1
      %p44 = por %p42, %p43
      %p46 = scmp.ne.s32.totalorder %s29, %s45
      %p47 = scmp.eq.s32.totalorder %s21, 0
      %p48 = por %p46, %p47
      %s50 = sadd.s32 %s49, 1
      %p53 = scmp.eq.s32.totalorder %s15, 1
      %p54 = scmp.ne.s32.totalorder %s49, %s51
      %p55 = scmp.eq.s32.totalorder %s15, 0
      %p56 = por %p54, %p55
      %p57 = scmp.ne.s32.totalorder %s49, %s51
      %p58 = scmp.eq.s32.totalorder %s20, 1
      %p59 = por %p57, %p58
      %p60 = scmp.ne.s32.totalorder %s51, %s52
      %p61 = scmp.eq.s32.totalorder %s20, 0
      %p62 = por %p60, %p61
      %p63 = scmp.ne.s32.totalorder %s51, %s52
      %p64 = scmp.eq.s32.totalorder %s21, 1
      %p65 = por %p63, %p64
      %p67 = scmp.ne.s32.totalorder %s52, %s66
      %p68 = scmp.eq.s32.totalorder %s21, 0
      %p69 = por %p67, %p68
      %s71 = sadd.s32 %s70, 1
      %p74 = scmp.eq.s32.totalorder %s15, 1
      %p75 = scmp.ne.s32.totalorder %s70, %s72
      %p76 = scmp.eq.s32.totalorder %s15, 0
      %p77 = por %p75, %p76
      %p78 = scmp.ne.s32.totalorder %s70, %s72
      %p79 = scmp.eq.s32.totalorder %s20, 1
      %p80 = por %p78, %p79
      %p81 = scmp.ne.s32.totalorder %s72, %s73
      %p82 = scmp.eq.s32.totalorder %s20, 0
      %p83 = por %p81, %p82
      %p84 = scmp.ne.s32.totalorder %s72, %s73
      %p85 = scmp.eq.s32.totalorder %s21, 1
      %p86 = por %p84, %p85
      %p88 = scmp.ne.s32.totalorder %s73, %s87
      %p89 = scmp.eq.s32.totalorder %s21, 0
      %p90 = por %p88, %p89
      %s92 = sadd.s32 %s91, 1
      %p95 = scmp.eq.s32.totalorder %s15, 1
      %p96 = scmp.ne.s32.totalorder %s91, %s93
      %p97 = scmp.eq.s32.totalorder %s15, 0
      %p98 = por %p96, %p97
      %p99 = scmp.ne.s32.totalorder %s91, %s93
      %p100 = scmp.eq.s32.totalorder %s20, 1
      %p101 = por %p99, %p100
      %p102 = scmp.ne.s32.totalorder %s93, %s94
      %p103 = scmp.eq.s32.totalorder %s20, 0
      %p104 = por %p102, %p103
      %p105 = scmp.ne.s32.totalorder %s93, %s94
      %p106 = scmp.eq.s32.totalorder %s21, 1
      %p107 = por %p105, %p106
      %p109 = scmp.ne.s32.totalorder %s94, %s108
      %p110 = scmp.eq.s32.totalorder %s21, 0
      %p111 = por %p109, %p110
      %s113 = sadd.s32 %s112, 1
      %p116 = scmp.eq.s32.totalorder %s15, 1
      %p117 = scmp.ne.s32.totalorder %s112, %s114
      %p118 = scmp.eq.s32.totalorder %s15, 0
      %p119 = por %p117, %p118
      %p120 = scmp.ne.s32.totalorder %s112, %s114
      %p121 = scmp.eq.s32.totalorder %s20, 1
      %p122 = por %p120, %p121
      %p123 = scmp.ne.s32.totalorder %s114, %s115
      %p124 = scmp.eq.s32.totalorder %s20, 0
      %p125 = por %p123, %p124
      %p126 = scmp.ne.s32.totalorder %s114, %s115
      %p127 = scmp.eq.s32.totalorder %s21, 1
      %p128 = por %p126, %p127
      %p130 = scmp.ne.s32.totalorder %s115, %s129
      %p131 = scmp.eq.s32.totalorder %s21, 0
      %p132 = por %p130, %p131
      %s133 = ssub.s32 %s15, %s22
      %p134 = scmp.eq.s32.totalorder %s133, 0
      %s136 = sadd.s32 %s135, 1
      %s137 = scalar_select %p134, %s135, %s136
      %p140 = pneg %p134
      %p141 = scmp.eq.s32.totalorder %s15, 1
      %p142 = por %p140, %p141
      %p143 = scmp.ne.s32.totalorder %s135, %s138
      %p144 = scmp.eq.s32.totalorder %s15, 0
      %p145 = por %p143, %p144
      %p146 = scmp.ne.s32.totalorder %s135, %s138
      %p147 = scmp.eq.s32.totalorder %s20, 1
      %p148 = por %p146, %p147
      %p149 = scmp.ne.s32.totalorder %s138, %s139
      %p150 = scmp.eq.s32.totalorder %s20, 0
      %p151 = por %p149, %p150
      %p152 = scmp.ne.s32.totalorder %s138, %s139
      %p153 = scmp.eq.s32.totalorder %s21, 1
      %p154 = por %p152, %p153
      %p156 = scmp.ne.s32.totalorder %s139, %s155
      %p157 = scmp.eq.s32.totalorder %s21, 0
      %p158 = por %p156, %p157
      %p159 = scmp.le.s32.totalorder 1, %s15
      %p160 = scmp.lt.s32.totalorder %s15, 3
      %p161 = pnand %p159, %p160
      %p162 = pneg %p161
      // Predicated region
      $region9: #{tpu_custom_call.1} parent=5 // pred_check
        _
      $region10: #{tpu_custom_call.1} parent=5 // pred_check_branch
        %164 = sbr.rel (%p161) target = $region12
      $region11: #{tpu_custom_call.1} parent=5 // pred_region
        %s165 = ssub.s32 %s15, 1
        // Predicated region
        $region13: #{tpu_custom_call.1} parent=11 // pred_check
          %p166 = pneg %p62
        $region14: #{tpu_custom_call.1} parent=11 // pred_check_branch
          %168 = sbr.rel (%p166) target = $region16
        $region15: #{tpu_custom_call.1} parent=11 // pred_region
          _
        $region16: #{tpu_custom_call.1} parent=11 // pred_fallthru
          _
        // Predicated region
        $region17: #{tpu_custom_call.1} parent=11 // pred_check
          %p169 = pneg %p83
        $region18: #{tpu_custom_call.1} parent=11 // pred_check_branch
          %171 = sbr.rel (%p169) target = $region20
        $region19: #{tpu_custom_call.1} parent=11 // pred_region
          _
        $region20: #{tpu_custom_call.1} parent=11 // pred_fallthru
          _
        // Predicated region
        $region21: #{tpu_custom_call.1} parent=11 // pred_check
          %p172 = pneg %p104
        $region22: #{tpu_custom_call.1} parent=11 // pred_check_branch
          %174 = sbr.rel (%p172) target = $region24
        $region23: #{tpu_custom_call.1} parent=11 // pred_region
          _
        $region24: #{tpu_custom_call.1} parent=11 // pred_fallthru
          _
        // Predicated region
        $region25: #{tpu_custom_call.1} parent=11 // pred_check
          %p175 = pneg %p125
        $region26: #{tpu_custom_call.1} parent=11 // pred_check_branch
          %177 = sbr.rel (%p175) target = $region28
        $region27: #{tpu_custom_call.1} parent=11 // pred_region
          %s179 = ssub.s32 16, 16
          %180 = vsyncadd [#allocation5], %s179
          %s182 = sshll.u32 %s4, 4
          %s183 = int_to_ptr.vmem [resolvable:$true] %s182
          %185 = dma.vmem_to_smem %s183, 16, [#allocation3], [#allocation5]
        $region28: #{tpu_custom_call.1} parent=11 // pred_fallthru
          _
      $region12: #{tpu_custom_call.1} parent=5 // pred_fallthru
        _
      %p186 = scmp.lt.s32.totalorder %s15, 2
      // Predicated region
      $region29: #{tpu_custom_call.1} parent=5 // pred_check
        %p187 = pneg %p186
      $region30: #{tpu_custom_call.1} parent=5 // pred_check_branch
        %189 = sbr.rel (%p187) target = $region32
      $region31: #{tpu_custom_call.1} parent=5 // pred_region
        // Predicated region
        $region33: #{tpu_custom_call.1} parent=31 // pred_check
          %p190 = pneg %p35
        $region34: #{tpu_custom_call.1} parent=31 // pred_check_branch
          %192 = sbr.rel (%p190) target = $region36
        $region35: #{tpu_custom_call.1} parent=31 // pred_region
          %s193 = sand.u32 %s25, 1
          %s194 = sand.u32 %s25, 1
          %s195 = smul.addr %s194, 32
          %s196 = scalar_lea.vmem [#allocation2], %s195
          %s197 = smul.addr %s15, 8
          %s198 = scalar_lea.vmem %s0, %s197
          // Predicated region
          $region37: #{tpu_custom_call.1} parent=35 // pred_check
            _
          $region38: #{tpu_custom_call.1} parent=35 // pred_check_branch
            %200 = sbr.rel (0) target = $region40
          $region39: #{tpu_custom_call.1} parent=35 // pred_region
            // Predicated region
            $region41: #{tpu_custom_call.1} parent=39 // pred_check
              _
            $region42: #{tpu_custom_call.1} parent=39 // pred_check_branch
              %202 = sbr.rel (0) target = $region44
            $region43: #{tpu_custom_call.1} parent=39 // pred_region
              // Predicated region
              $region56: #{tpu_custom_call.1} parent=43 // pred_check
                _
              $region57: #{tpu_custom_call.1} parent=43 // pred_check_branch
                %223 = sbr.rel (0) target = $region59
              $region58: #{tpu_custom_call.1} parent=43 // pred_region
                loop: start=0, step=1, limit=1
                $region60: #{tpu_custom_call.1} parent=58 // loop_pre_header
                  _
                $region61: #{tpu_custom_call.1} parent=58 // loop_header
                  %s225 = sphi 0, %s229
                  %p226 = scmp.ge.s32.totalorder %s225, 1
                  %s230 = sphi %s198, %s198
                  %s231 = sphi %s196, %s196
                $region62: #{tpu_custom_call.1} parent=58 // loop_header_branch
                  %228 = sbr.rel (%p226) target = $region66
                $region63: #{tpu_custom_call.1} parent=58 // loop_body
                  %v232 = vld [vmem:[%s230] sm:$0xff]
                  %233 = vst [vmem:[%s231] sm:$0xff] %v232
                  %v234 = vld [vmem:[%s230 + $0x10] sm:$0xff]
                  %235 = vst [vmem:[%s231 + $0x8] sm:$0xff] %v234
                  %v236 = vld [vmem:[%s230 + $0x20] sm:$0xff]
                  %237 = vst [vmem:[%s231 + $0x10] sm:$0xff] %v236
                  %v238 = vld [vmem:[%s230 + $0x30] sm:$0xff]
                  %239 = vst [vmem:[%s231 + $0x18] sm:$0xff] %v238
                $region64: #{tpu_custom_call.1} parent=58 // loop_footer
                  %s229 = sadd.s32 1, %s225
                $region65: #{tpu_custom_call.1} parent=58 // loop_footer_branch
                  %224 = sbr.rel target = $region61
                $region66: #{tpu_custom_call.1} parent=58 // loop_exit
                  _
              $region59: #{tpu_custom_call.1} parent=43 // pred_fallthru
                _
              // Predicated region
              $region67: #{tpu_custom_call.1} parent=43 // pred_check
                _
              $region68: #{tpu_custom_call.1} parent=43 // pred_check_branch
                %241 = sbr.rel target = $region70
              $region69: #{tpu_custom_call.1} parent=43 // pred_region
                _
              $region70: #{tpu_custom_call.1} parent=43 // pred_fallthru
                _
            $region44: #{tpu_custom_call.1} parent=39 // pred_fallthru
              _
            // Predicated region
            $region45: #{tpu_custom_call.1} parent=39 // pred_check
              _
            $region46: #{tpu_custom_call.1} parent=39 // pred_check_branch
              %204 = sbr.rel target = $region48
            $region47: #{tpu_custom_call.1} parent=39 // pred_region
              loop: start=0, step=1, limit=1
              $region49: #{tpu_custom_call.1} parent=47 // loop_pre_header
                _
              $region50: #{tpu_custom_call.1} parent=47 // loop_header
                %s207 = sphi 0, %s211
                %p208 = scmp.ge.s32.totalorder %s207, 1
                %s212 = sphi %s198, %s198
                %s213 = sphi %s196, %s196
              $region51: #{tpu_custom_call.1} parent=47 // loop_header_branch
                %210 = sbr.rel (%p208) target = $region55
              $region52: #{tpu_custom_call.1} parent=47 // loop_body
                %v214 = vld [vmem:[%s212] sm:$0xff]
                %215 = vst [vmem:[%s213] sm:$0xff] %v214
                %v216 = vld [vmem:[%s212 + $0x10] sm:$0xff]
                %217 = vst [vmem:[%s213 + $0x8] sm:$0xff] %v216
                %v218 = vld [vmem:[%s212 + $0x20] sm:$0xff]
                %219 = vst [vmem:[%s213 + $0x10] sm:$0xff] %v218
                %v220 = vld [vmem:[%s212 + $0x30] sm:$0xff]
                %221 = vst [vmem:[%s213 + $0x18] sm:$0xff] %v220
              $region53: #{tpu_custom_call.1} parent=47 // loop_footer
                %s211 = sadd.s32 1, %s207
              $region54: #{tpu_custom_call.1} parent=47 // loop_footer_branch
                %206 = sbr.rel target = $region50
              $region55: #{tpu_custom_call.1} parent=47 // loop_exit
                _
            $region48: #{tpu_custom_call.1} parent=39 // pred_fallthru
              _
          $region40: #{tpu_custom_call.1} parent=35 // pred_fallthru
            _
          %242 = vnop
        $region36: #{tpu_custom_call.1} parent=31 // pred_fallthru
          _
      $region32: #{tpu_custom_call.1} parent=5 // pred_fallthru
        _
      %p243 = scmp.le.s32.totalorder 1, %s15
      %p244 = scmp.lt.s32.totalorder %s15, 3
      %p245 = pnand %p243, %p244
      %p246 = pneg %p245
      // Predicated region
      $region71: #{tpu_custom_call.1} parent=5 // pred_check
        _
      $region72: #{tpu_custom_call.1} parent=5 // pred_check_branch
        %248 = sbr.rel (%p245) target = $region74
      $region73: #{tpu_custom_call.1} parent=5 // pred_region
        %s249 = ssub.s32 %s15, 1
        %s250 = sand.u32 %s28, 1
        %s251 = sand.u32 %s28, 1
        %s252 = smul.addr %s251, 32
        %s253 = scalar_lea.vmem [#allocation2], %s252
        // Predicated region
        $region75: #{tpu_custom_call.1} parent=73 // pred_check
          %p254 = pneg %p41
        $region76: #{tpu_custom_call.1} parent=73 // pred_check_branch
          %256 = sbr.rel (%p254) target = $region78
        $region77: #{tpu_custom_call.1} parent=73 // pred_region
          _
        $region78: #{tpu_custom_call.1} parent=73 // pred_fallthru
          _
        // Predicated region
        $region79: #{tpu_custom_call.1} parent=73 // pred_check
          %p257 = pneg %p125
        $region80: #{tpu_custom_call.1} parent=73 // pred_check_branch
          %259 = sbr.rel (%p257) target = $region82
        $region81: #{tpu_custom_call.1} parent=73 // pred_region
          %260 = dma.done [#allocation5], 16
        $region82: #{tpu_custom_call.1} parent=73 // pred_fallthru
          _
        %261 = sfence
        %s262 = sand.u32 %s28, 1
        %s263 = sand.u32 %s28, 1
        %s264 = smul.addr %s263, 32
        %s265 = scalar_lea.vmem [#allocation2], %s264
        %p266 = pneg %p41
        %p267 = pneg %p38
        %p268 = pneg %p62
        %p269 = pneg %p59
        %p270 = pneg %p83
        %p271 = pneg %p80
        %p272 = pneg %p104
        %p273 = pneg %p101
        %p274 = pneg %p125
        %p275 = pneg %p122
        %p276 = pneg %p151
        %p277 = pneg %p148
        %s278 = sand.u32 %s138, 1
        %s279 = scalar_lea.sflag [#allocation4], %s278
        %s280 = sand.u32 %s138, 1
        %s281 = smul.addr %s280, 32
        %s282 = scalar_lea.vmem [#allocation6], %s281
        %v283 = vld [vmem:[%s253] sm:$0xff]
        %v284 = vld [vmem:[%s253 + $0x8] sm:$0xff]
        %v285 = vld [vmem:[%s253 + $0x10] sm:$0xff]
        %v286 = vld [vmem:[%s253 + $0x18] sm:$0xff]
        %v287 = vld [vmem:[%s1] sm:$0xff]
        %v288 = vld [vmem:[%s1 + $0x8] sm:$0xff]
        %v289 = vld [vmem:[%s1 + $0x10] sm:$0xff]
        %v290 = vld [vmem:[%s1 + $0x18] sm:$0xff]
        %v291 = vld [vmem:[%s1 + $0x20] sm:$0xff]
        %v292 = vld [vmem:[%s1 + $0x28] sm:$0xff]
        %v293 = vld [vmem:[%s1 + $0x30] sm:$0xff]
        %v294 = vld [vmem:[%s1 + $0x38] sm:$0xff]
        %v295 = vld [vmem:[%s2] sm:$0xff]
        %v296 = vld [vmem:[%s2 + $0x8] sm:$0xff]
        %v297 = vld [vmem:[%s2 + $0x10] sm:$0xff]
        %v298 = vld [vmem:[%s2 + $0x18] sm:$0xff]
        %v299 = vld [vmem:[%s2 + $0x20] sm:$0xff]
        %v300 = vld [vmem:[%s2 + $0x28] sm:$0xff]
        %v301 = vld [vmem:[%s2 + $0x30] sm:$0xff]
        %v302 = vld [vmem:[%s2 + $0x38] sm:$0xff]
        %304 = vset.pattern.permute.xlu0 0
        %305 = vperm.xlu0 %304, %v295
        %v306 = vpop.permute.xlu0 %305
        %309 = vset.pattern.permute.xlu0 0
        %310 = vperm.xlu0 %309, %v296
        %v311 = vpop.permute.xlu0 %310
        %314 = vset.pattern.permute.xlu0 0
        %315 = vperm.xlu0 %314, %v297
        %v316 = vpop.permute.xlu0 %315
        %319 = vset.pattern.permute.xlu0 0
        %320 = vperm.xlu0 %319, %v298
        %v321 = vpop.permute.xlu0 %320
        %324 = vset.pattern.permute.xlu0 0
        %325 = vperm.xlu0 %324, %v299
        %v326 = vpop.permute.xlu0 %325
        %329 = vset.pattern.permute.xlu0 0
        %330 = vperm.xlu0 %329, %v300
        %v331 = vpop.permute.xlu0 %330
        %334 = vset.pattern.permute.xlu0 0
        %335 = vperm.xlu0 %334, %v301
        %v336 = vpop.permute.xlu0 %335
        %339 = vset.pattern.permute.xlu0 0
        %340 = vperm.xlu0 %339, %v302
        %v341 = vpop.permute.xlu0 %340
        %vm343 = vcmask 261120
        %v345 = vsel %vm343, %v287, 0
        %v348 = vsel %vm343, %v288, 0
        %v351 = vsel %vm343, %v289, 0
        %v354 = vsel %vm343, %v290, 0
        %v357 = vsel %vm343, %v291, 0
        %v360 = vsel %vm343, %v292, 0
        %v363 = vsel %vm343, %v293, 0
        %v366 = vsel %vm343, %v294, 0
        %368 = vmatprep.subr.mxu0 0.0
        %369 = vmatpush1.msra.mxu0 %v283
        %370 = vmatprep.subr.mxu0 0.0
        %371 = vmatpush1.msra.mxu0 %v284
        %372 = vmatprep.subr.mxu0 0.0
        %373 = vmatpush1.msra.mxu0 %v285
        %374 = vmatprep.subr.mxu0 0.0
        %375 = vmatpush1.msra.mxu0 %v286
        %376 = vmatprep.subr.mxu0 0.0
        %377 = vmatpush1.msra.mxu0 0.0
        %378 = vmatprep.subr.mxu0 0.0
        %379 = vmatpush1.msra.mxu0 0.0
        %380 = vmatprep.subr.mxu0 0.0
        %381 = vmatpush1.msra.mxu0 0.0
        %382 = vmatprep.subr.mxu0 0.0
        %383 = vmatpush1.msra.mxu0 0.0
        %384 = vmatprep.subr.mxu0 0.0
        %385 = vmatpush1.msra.mxu0 0.0
        %386 = vmatprep.subr.mxu0 0.0
        %387 = vmatpush1.msra.mxu0 0.0
        %388 = vmatprep.subr.mxu0 0.0
        %389 = vmatpush1.msra.mxu0 0.0
        %390 = vmatprep.subr.mxu0 0.0
        %391 = vmatpush1.msra.mxu0 0.0
        %392 = vmatprep.subr.mxu0 0.0
        %393 = vmatpush1.msra.mxu0 0.0
        %394 = vmatprep.subr.mxu0 0.0
        %395 = vmatpush1.msra.mxu0 0.0
        %396 = vmatprep.subr.mxu0 0.0
        %397 = vmatpush1.msra.mxu0 0.0
        %398 = vmatprep.subr.mxu0 0.0
        %399 = vmatpush1.msra.mxu0 0.0
        %400 = vmatprep.subr.mxu0 0.0
        %401 = vmatpush1.msra.mxu0 0.0
        %402 = vmatprep.subr.mxu0 0.0
        %403 = vmatpush1.msra.mxu0 0.0
        %404 = vmatprep.subr.mxu0 0.0
        %405 = vmatpush1.msra.mxu0 0.0
        %406 = vmatprep.subr.mxu0 0.0
        %407 = vmatpush1.msra.mxu0 0.0
        %408 = vmatprep.subr.mxu0 0.0
        %409 = vmatpush1.msra.mxu0 0.0
        %410 = vmatprep.subr.mxu0 0.0
        %411 = vmatpush1.msra.mxu0 0.0
        %412 = vmatprep.subr.mxu0 0.0
        %413 = vmatpush1.msra.mxu0 0.0
        %414 = vmatprep.subr.mxu0 0.0
        %415 = vmatpush1.msra.mxu0 0.0
        %416 = vmatprep.subr.mxu0 0.0
        %417 = vmatpush1.msra.mxu0 0.0
        %418 = vmatprep.subr.mxu0 0.0
        %419 = vmatpush1.msra.mxu0 0.0
        %420 = vmatprep.subr.mxu0 0.0
        %421 = vmatpush1.msra.mxu0 0.0
        %422 = vmatprep.subr.mxu0 0.0
        %423 = vmatpush1.msra.mxu0 0.0
        %424 = vmatprep.subr.mxu0 0.0
        %425 = vmatpush1.msra.mxu0 0.0
        %426 = vmatprep.subr.mxu0 0.0
        %427 = vmatpush1.msra.mxu0 0.0
        %428 = vmatprep.subr.mxu0 0.0
        %429 = vmatpush1.msra.mxu0 0.0
        %430 = vmatprep.subr.mxu0 0.0
        %431 = vmatpush1.msra.mxu0 0.0
        %432 = vmatprep.mubr.f32.mxu0 0.0
        %433 = vmatmul.mubr.f32.gmra.mrb[0].mxu0 %v345
        %v434 = vpop.f32.mrb[0].mxu0
        %v435 = vadd.f32 %v306, %v434
        %v436 = vpop.f32.mrb[0].mxu0
        %437 = vmatprep.mubr.f32.mxu0 0.0
        %438 = vmatmul.mubr.f32.gmra.mrb[0].mxu0 %v348
        %v439 = vpop.f32.mrb[0].mxu0
        %v440 = vadd.f32 %v311, %v439
        %v441 = vpop.f32.mrb[0].mxu0
        %442 = vmatprep.mubr.f32.mxu0 0.0
        %443 = vmatmul.mubr.f32.gmra.mrb[0].mxu0 %v351
        %v444 = vpop.f32.mrb[0].mxu0
        %v445 = vadd.f32 %v316, %v444
        %v446 = vpop.f32.mrb[0].mxu0
        %447 = vmatprep.mubr.f32.mxu0 0.0
        %448 = vmatmul.mubr.f32.gmra.mrb[0].mxu0 %v354
        %v449 = vpop.f32.mrb[0].mxu0
        %v450 = vadd.f32 %v321, %v449
        %v451 = vpop.f32.mrb[0].mxu0
        %452 = vmatprep.mubr.f32.mxu0 0.0
        %453 = vmatmul.mubr.f32.gmra.mrb[0].mxu0 %v357
        %v454 = vpop.f32.mrb[0].mxu0
        %v455 = vadd.f32 %v326, %v454
        %v456 = vpop.f32.mrb[0].mxu0
        %457 = vmatprep.mubr.f32.mxu0 0.0
        %458 = vmatmul.mubr.f32.gmra.mrb[0].mxu0 %v360
        %v459 = vpop.f32.mrb[0].mxu0
        %v460 = vadd.f32 %v331, %v459
        %v461 = vpop.f32.mrb[0].mxu0
        %462 = vmatprep.mubr.f32.mxu0 0.0
        %463 = vmatmul.mubr.f32.gmra.mrb[0].mxu0 %v363
        %v464 = vpop.f32.mrb[0].mxu0
        %v465 = vadd.f32 %v336, %v464
        %v466 = vpop.f32.mrb[0].mxu0
        %467 = vmatprep.mubr.f32.mxu0 0.0
        %468 = vmatmul.mubr.f32.gmra.mrb[0].mxu0 %v366
        %v469 = vpop.f32.mrb[0].mxu0
        %v470 = vadd.f32 %v341, %v469
        %v471 = vpop.f32.mrb[0].mxu0
        %472 = vdwg.mxu0
        %v473 = vmax.f32 %v435, 0.0
        %v474 = vmax.f32 %v440, 0.0
        %v475 = vmax.f32 %v445, 0.0
        %v476 = vmax.f32 %v450, 0.0
        %v477 = vmax.f32 %v455, 0.0
        %v478 = vmax.f32 %v460, 0.0
        %v479 = vmax.f32 %v465, 0.0
        %v480 = vmax.f32 %v470, 0.0
        %v481 = vmul.f32 %v473, %v473
        %v482 = vmul.f32 %v474, %v474
        %v483 = vadd.f32 %v481, %v482
        %v484 = vrot.slane %v483, 4
        %v485 = vadd.f32 %v483, %v484
        %v486 = vrot.slane %v485, 2
        %v487 = vadd.f32 %v485, %v486
        %v488 = vrot.slane %v487, 1
        %v489 = vadd.f32 %v487, %v488
        %v490 = vmul.f32 %v489, 0.25
        %v491 = vmul.f32 %v473, %v475
        %v492 = vmul.f32 %v474, %v476
        %v493 = vadd.f32 %v491, %v492
        %v494 = vrot.slane %v493, 4
        %v495 = vadd.f32 %v493, %v494
        %v496 = vrot.slane %v495, 2
        %v497 = vadd.f32 %v495, %v496
        %v498 = vrot.slane %v497, 1
        %v499 = vadd.f32 %v497, %v498
        %v500 = vmul.f32 %v499, 0.25
        %v501 = vmul.f32 %v473, %v477
        %v502 = vmul.f32 %v474, %v478
        %v503 = vadd.f32 %v501, %v502
        %v504 = vrot.slane %v503, 4
        %v505 = vadd.f32 %v503, %v504
        %v506 = vrot.slane %v505, 2
        %v507 = vadd.f32 %v505, %v506
        %v508 = vrot.slane %v507, 1
        %v509 = vadd.f32 %v507, %v508
        %v510 = vmul.f32 %v509, 0.25
        %v511 = vmul.f32 %v473, %v479
        %v512 = vmul.f32 %v474, %v480
        %v513 = vadd.f32 %v511, %v512
        %v514 = vrot.slane %v513, 4
        %v515 = vadd.f32 %v513, %v514
        %v516 = vrot.slane %v515, 2
        %v517 = vadd.f32 %v515, %v516
        %v518 = vrot.slane %v517, 1
        %v519 = vadd.f32 %v517, %v518
        %v520 = vmul.f32 %v519, 0.25
        %v521 = vmul.f32 %v475, %v475
        %v522 = vmul.f32 %v476, %v476
        %v523 = vadd.f32 %v521, %v522
        %v524 = vrot.slane %v523, 4
        %v525 = vadd.f32 %v523, %v524
        %v526 = vrot.slane %v525, 2
        %v527 = vadd.f32 %v525, %v526
        %v528 = vrot.slane %v527, 1
        %v529 = vadd.f32 %v527, %v528
        %v530 = vmul.f32 %v529, 0.25
        %v531 = vmul.f32 %v475, %v477
        %v532 = vmul.f32 %v476, %v478
        %v533 = vadd.f32 %v531, %v532
        %v534 = vrot.slane %v533, 4
        %v535 = vadd.f32 %v533, %v534
        %v536 = vrot.slane %v535, 2
        %v537 = vadd.f32 %v535, %v536
        %v538 = vrot.slane %v537, 1
        %v539 = vadd.f32 %v537, %v538
        %v540 = vmul.f32 %v539, 0.25
        %v541 = vmul.f32 %v475, %v479
        %v542 = vmul.f32 %v476, %v480
        %v543 = vadd.f32 %v541, %v542
        %v544 = vrot.slane %v543, 4
        %v545 = vadd.f32 %v543, %v544
        %v546 = vrot.slane %v545, 2
        %v547 = vadd.f32 %v545, %v546
        %v548 = vrot.slane %v547, 1
        %v549 = vadd.f32 %v547, %v548
        %v550 = vmul.f32 %v549, 0.25
        %v551 = vmul.f32 %v477, %v477
        %v552 = vmul.f32 %v478, %v478
        %v553 = vadd.f32 %v551, %v552
        %v554 = vrot.slane %v553, 4
        %v555 = vadd.f32 %v553, %v554
        %v556 = vrot.slane %v555, 2
        %v557 = vadd.f32 %v555, %v556
        %v558 = vrot.slane %v557, 1
        %v559 = vadd.f32 %v557, %v558
        %v560 = vmul.f32 %v559, 0.25
        %v561 = vmul.f32 %v477, %v479
        %v562 = vmul.f32 %v478, %v480
        %v563 = vadd.f32 %v561, %v562
        %v564 = vrot.slane %v563, 4
        %v565 = vadd.f32 %v563, %v564
        %v566 = vrot.slane %v565, 2
        %v567 = vadd.f32 %v565, %v566
        %v568 = vrot.slane %v567, 1
        %v569 = vadd.f32 %v567, %v568
        %v570 = vmul.f32 %v569, 0.25
        %v571 = vmul.f32 %v479, %v479
        %v572 = vmul.f32 %v480, %v480
        %v573 = vadd.f32 %v571, %v572
        %v574 = vrot.slane %v573, 4
        %v575 = vadd.f32 %v573, %v574
        %v576 = vrot.slane %v575, 2
        %v577 = vadd.f32 %v575, %v576
        %v578 = vrot.slane %v577, 1
        %v579 = vadd.f32 %v577, %v578
        %v580 = vmul.f32 %v579, 0.25
        %v581 = vmax.f32 %v490, %v500
        %v582 = vmax.f32 %v581, %v510
        %v583 = vmax.f32 %v582, %v520
        %v584 = vsub.f32 %v490, %v583
        %v585 = vmul.f32 %v584, 1.442695
        %v586 = vpow.pop %v585
        %v587 = vsub.f32 %v500, %v583
        %v588 = vmul.f32 %v587, 1.442695
        %v589 = vpow.pop %v588
        %v590 = vsub.f32 %v510, %v583
        %v591 = vmul.f32 %v590, 1.442695
        %v592 = vpow.pop %v591
        %v593 = vsub.f32 %v520, %v583
        %v594 = vmul.f32 %v593, 1.442695
        %v595 = vpow.pop %v594
        %v596 = vadd.f32 %v586, %v589
        %v597 = vadd.f32 %v596, %v592
        %v598 = vadd.f32 %v597, %v595
        %v599 = vrcp.pop %v598
        %v600 = vmul.f32 %v586, %v599
        %v601 = vmul.f32 %v600, %v473
        %v602 = vmul.f32 %v600, %v474
        %v603 = vmul.f32 %v589, %v599
        %v604 = vmul.f32 %v603, %v475
        %v605 = vmul.f32 %v603, %v476
        %v606 = vadd.f32 %v601, %v604
        %v607 = vadd.f32 %v602, %v605
        %v608 = vmul.f32 %v592, %v599
        %v609 = vmul.f32 %v608, %v477
        %v610 = vmul.f32 %v608, %v478
        %v611 = vadd.f32 %v606, %v609
        %v612 = vadd.f32 %v607, %v610
        %v613 = vmul.f32 %v595, %v599
        %v614 = vmul.f32 %v613, %v479
        %v615 = vmul.f32 %v613, %v480
        %v616 = vadd.f32 %v611, %v614
        %v617 = vadd.f32 %v612, %v615
        %v618 = vmax.f32 %v500, %v530
        %v619 = vmax.f32 %v618, %v540
        %v620 = vmax.f32 %v619, %v550
        %v621 = vsub.f32 %v500, %v620
        %v622 = vmul.f32 %v621, 1.442695
        %v623 = vpow.pop %v622
        %v624 = vsub.f32 %v530, %v620
        %v625 = vmul.f32 %v624, 1.442695
        %v626 = vpow.pop %v625
        %v627 = vsub.f32 %v540, %v620
        %v628 = vmul.f32 %v627, 1.442695
        %v629 = vpow.pop %v628
        %v630 = vsub.f32 %v550, %v620
        %v631 = vmul.f32 %v630, 1.442695
        %v632 = vpow.pop %v631
        %v633 = vadd.f32 %v623, %v626
        %v634 = vadd.f32 %v633, %v629
        %v635 = vadd.f32 %v634, %v632
        %v636 = vrcp.pop %v635
        %v637 = vmul.f32 %v623, %v636
        %v638 = vmul.f32 %v637, %v473
        %v639 = vmul.f32 %v637, %v474
        %v640 = vmul.f32 %v626, %v636
        %v641 = vmul.f32 %v640, %v475
        %v642 = vmul.f32 %v640, %v476
        %v643 = vadd.f32 %v638, %v641
        %v644 = vadd.f32 %v639, %v642
        %v645 = vmul.f32 %v629, %v636
        %v646 = vmul.f32 %v645, %v477
        %v647 = vmul.f32 %v645, %v478
        %v648 = vadd.f32 %v643, %v646
        %v649 = vadd.f32 %v644, %v647
        %v650 = vmul.f32 %v632, %v636
        %v651 = vmul.f32 %v650, %v479
        %v652 = vmul.f32 %v650, %v480
        %v653 = vadd.f32 %v648, %v651
        %v654 = vadd.f32 %v649, %v652
        %v655 = vmax.f32 %v510, %v540
        %v656 = vmax.f32 %v655, %v560
        %v657 = vmax.f32 %v656, %v570
        %v658 = vsub.f32 %v510, %v657
        %v659 = vmul.f32 %v658, 1.442695
        %v660 = vpow.pop %v659
        %v661 = vsub.f32 %v540, %v657
        %v662 = vmul.f32 %v661, 1.442695
        %v663 = vpow.pop %v662
        %v664 = vsub.f32 %v560, %v657
        %v665 = vmul.f32 %v664, 1.442695
        %v666 = vpow.pop %v665
        %v667 = vsub.f32 %v570, %v657
        %v668 = vmul.f32 %v667, 1.442695
        %v669 = vpow.pop %v668
        %v670 = vadd.f32 %v660, %v663
        %v671 = vadd.f32 %v670, %v666
        %v672 = vadd.f32 %v671, %v669
        %v673 = vrcp.pop %v672
        %v674 = vmul.f32 %v660, %v673
        %v675 = vmul.f32 %v674, %v473
        %v676 = vmul.f32 %v674, %v474
        %v677 = vmul.f32 %v663, %v673
        %v678 = vmul.f32 %v677, %v475
        %v679 = vmul.f32 %v677, %v476
        %v680 = vadd.f32 %v675, %v678
        %v681 = vadd.f32 %v676, %v679
        %v682 = vmul.f32 %v666, %v673
        %v683 = vmul.f32 %v682, %v477
        %v684 = vmul.f32 %v682, %v478
        %v685 = vadd.f32 %v680, %v683
        %v686 = vadd.f32 %v681, %v684
        %v687 = vmul.f32 %v669, %v673
        %v688 = vmul.f32 %v687, %v479
        %v689 = vmul.f32 %v687, %v480
        %v690 = vadd.f32 %v685, %v688
        %v691 = vadd.f32 %v686, %v689
        %v692 = vmax.f32 %v520, %v550
        %v693 = vmax.f32 %v692, %v570
        %v694 = vmax.f32 %v693, %v580
        %v695 = vsub.f32 %v520, %v694
        %v696 = vmul.f32 %v695, 1.442695
        %v697 = vpow.pop %v696
        %v698 = vsub.f32 %v550, %v694
        %v699 = vmul.f32 %v698, 1.442695
        %v700 = vpow.pop %v699
        %v701 = vsub.f32 %v570, %v694
        %v702 = vmul.f32 %v701, 1.442695
        %v703 = vpow.pop %v702
        %v704 = vsub.f32 %v580, %v694
        %v705 = vmul.f32 %v704, 1.442695
        %v706 = vpow.pop %v705
        %v707 = vadd.f32 %v697, %v700
        %v708 = vadd.f32 %v707, %v703
        %v709 = vadd.f32 %v708, %v706
        %v710 = vrcp.pop %v709
        %v711 = vmul.f32 %v697, %v710
        %v712 = vmul.f32 %v711, %v473
        %v713 = vmul.f32 %v711, %v474
        %v714 = vmul.f32 %v700, %v710
        %v715 = vmul.f32 %v714, %v475
        %v716 = vmul.f32 %v714, %v476
        %v717 = vadd.f32 %v712, %v715
        %v718 = vadd.f32 %v713, %v716
        %v719 = vmul.f32 %v703, %v710
        %v720 = vmul.f32 %v719, %v477
        %v721 = vmul.f32 %v719, %v478
        %v722 = vadd.f32 %v717, %v720
        %v723 = vadd.f32 %v718, %v721
        %v724 = vmul.f32 %v706, %v710
        %v725 = vmul.f32 %v724, %v479
        %v726 = vmul.f32 %v724, %v480
        %v727 = vadd.f32 %v722, %v725
        %v728 = vadd.f32 %v723, %v726
        %s729 = sld [smem:[#allocation3]]
        %v730 = vstv %s729
        %v731 = vmul.f32 %v616, %v730
        %v732 = vmul.f32 %v617, %v730
        %s733 = sld [smem:[#allocation3 + $0x1]]
        %v734 = vstv %s733
        %v735 = vmul.f32 %v653, %v734
        %v736 = vmul.f32 %v654, %v734
        %v737 = vadd.f32 %v731, %v735
        %v738 = vadd.f32 %v732, %v736
        %s739 = sld [smem:[#allocation3 + $0x2]]
        %v740 = vstv %s739
        %v741 = vmul.f32 %v690, %v740
        %v742 = vmul.f32 %v691, %v740
        %v743 = vadd.f32 %v737, %v741
        %v744 = vadd.f32 %v738, %v742
        %s745 = sld [smem:[#allocation3 + $0x3]]
        %v746 = vstv %s745
        %v747 = vmul.f32 %v727, %v746
        %v748 = vmul.f32 %v728, %v746
        %v749 = vadd.f32 %v743, %v747
        %v750 = vadd.f32 %v744, %v748
        %v751 = vld [vmem:[%s3] sm:$0xff]
        %v752 = vld [vmem:[%s3 + $0x8] sm:$0xff]
        %v753 = vld [vmem:[%s3 + $0x10] sm:$0xff]
        %v754 = vld [vmem:[%s3 + $0x18] sm:$0xff]
        %vm755 = vcmask 130048
        %v757 = vsel %vm755, %v751, 0
        %v760 = vsel %vm755, %v752, 0
        %v763 = vsel %vm755, %v753, 0
        %v766 = vsel %vm755, %v754, 0
        %768 = vmatprep.subr.mxu0 0.0
        %769 = vmatpush1.msra.mxu0 %v749
        %770 = vmatprep.subr.mxu0 0.0
        %771 = vmatpush1.msra.mxu0 %v750
        %772 = vmatprep.subr.mxu0 0.0
        %773 = vmatpush1.msra.mxu0 0.0
        %774 = vmatprep.subr.mxu0 0.0
        %775 = vmatpush1.msra.mxu0 0.0
        %776 = vmatprep.subr.mxu0 0.0
        %777 = vmatpush1.msra.mxu0 0.0
        %778 = vmatprep.subr.mxu0 0.0
        %779 = vmatpush1.msra.mxu0 0.0
        %780 = vmatprep.subr.mxu0 0.0
        %781 = vmatpush1.msra.mxu0 0.0
        %782 = vmatprep.subr.mxu0 0.0
        %783 = vmatpush1.msra.mxu0 0.0
        %784 = vmatprep.subr.mxu0 0.0
        %785 = vmatpush1.msra.mxu0 0.0
        %786 = vmatprep.subr.mxu0 0.0
        %787 = vmatpush1.msra.mxu0 0.0
        %788 = vmatprep.subr.mxu0 0.0
        %789 = vmatpush1.msra.mxu0 0.0
        %790 = vmatprep.subr.mxu0 0.0
        %791 = vmatpush1.msra.mxu0 0.0
        %792 = vmatprep.subr.mxu0 0.0
        %793 = vmatpush1.msra.mxu0 0.0
        %794 = vmatprep.subr.mxu0 0.0
        %795 = vmatpush1.msra.mxu0 0.0
        %796 = vmatprep.subr.mxu0 0.0
        %797 = vmatpush1.msra.mxu0 0.0
        %798 = vmatprep.subr.mxu0 0.0
        %799 = vmatpush1.msra.mxu0 0.0
        %800 = vmatprep.subr.mxu0 0.0
        %801 = vmatpush1.msra.mxu0 0.0
        %802 = vmatprep.subr.mxu0 0.0
        %803 = vmatpush1.msra.mxu0 0.0
        %804 = vmatprep.subr.mxu0 0.0
        %805 = vmatpush1.msra.mxu0 0.0
        %806 = vmatprep.subr.mxu0 0.0
        %807 = vmatpush1.msra.mxu0 0.0
        %808 = vmatprep.subr.mxu0 0.0
        %809 = vmatpush1.msra.mxu0 0.0
        %810 = vmatprep.subr.mxu0 0.0
        %811 = vmatpush1.msra.mxu0 0.0
        %812 = vmatprep.subr.mxu0 0.0
        %813 = vmatpush1.msra.mxu0 0.0
        %814 = vmatprep.subr.mxu0 0.0
        %815 = vmatpush1.msra.mxu0 0.0
        %816 = vmatprep.subr.mxu0 0.0
        %817 = vmatpush1.msra.mxu0 0.0
        %818 = vmatprep.subr.mxu0 0.0
        %819 = vmatpush1.msra.mxu0 0.0
        %820 = vmatprep.subr.mxu0 0.0
        %821 = vmatpush1.msra.mxu0 0.0
        %822 = vmatprep.subr.mxu0 0.0
        %823 = vmatpush1.msra.mxu0 0.0
        %824 = vmatprep.subr.mxu0 0.0
        %825 = vmatpush1.msra.mxu0 0.0
        %826 = vmatprep.subr.mxu0 0.0
        %827 = vmatpush1.msra.mxu0 0.0
        %828 = vmatprep.subr.mxu0 0.0
        %829 = vmatpush1.msra.mxu0 0.0
        %830 = vmatprep.subr.mxu0 0.0
        %831 = vmatpush1.msra.mxu0 0.0
        %832 = vmatprep.mubr.f32.mxu0 0.0
        %833 = vmatmul.mubr.f32.gmra.mrb[0].mxu0 %v757
        %v834 = vpop.f32.mrb[0].mxu0
        %v835 = vadd.f32 0.0, %v834
        %v836 = vpop.f32.mrb[0].mxu0
        %837 = vmatprep.mubr.f32.mxu0 0.0
        %838 = vmatmul.mubr.f32.gmra.mrb[0].mxu0 %v760
        %v839 = vpop.f32.mrb[0].mxu0
        %v840 = vadd.f32 0.0, %v839
        %v841 = vpop.f32.mrb[0].mxu0
        %842 = vmatprep.mubr.f32.mxu0 0.0
        %843 = vmatmul.mubr.f32.gmra.mrb[0].mxu0 %v763
        %v844 = vpop.f32.mrb[0].mxu0
        %v845 = vadd.f32 0.0, %v844
        %v846 = vpop.f32.mrb[0].mxu0
        %847 = vmatprep.mubr.f32.mxu0 0.0
        %848 = vmatmul.mubr.f32.gmra.mrb[0].mxu0 %v766
        %v849 = vpop.f32.mrb[0].mxu0
        %v850 = vadd.f32 0.0, %v849
        %v851 = vpop.f32.mrb[0].mxu0
        %852 = vdwg.mxu0
        %v853 = vadd.f32 %v283, %v835
        %v854 = vadd.f32 %v284, %v840
        %v855 = vadd.f32 %v285, %v845
        %v856 = vadd.f32 %v286, %v850
        %857 = vst [vmem:[%s282] sm:$0xff] %v853
        %858 = vst [vmem:[%s282 + $0x8] sm:$0xff] %v854
        %859 = vst [vmem:[%s282 + $0x10] sm:$0xff] %v855
        %860 = vst [vmem:[%s282 + $0x18] sm:$0xff] %v856
        %s861 = sand.u32 %s138, 1
        %s862 = scalar_lea.sflag [#allocation4], %s861
        %s863 = sand.u32 %s138, 1
        %s864 = smul.addr %s863, 32
        %s865 = scalar_lea.vmem [#allocation6], %s864
        // Predicated region
        $region83: #{tpu_custom_call.1} parent=73 // pred_check
          %p866 = pneg %p148
        $region84: #{tpu_custom_call.1} parent=73 // pred_check_branch
          %868 = sbr.rel (%p866) target = $region86
        $region85: #{tpu_custom_call.1} parent=73 // pred_region
          %s870 = ssub.s32 512, 512
          %871 = vsyncadd %s862, %s870
          %s872 = smul.addr %s20, 128
          %s873 = scalar_lea.hbm %s5, %s872
          %s874 = sshll.u32 %s865, 4
          %s875 = int_to_ptr.vmem [resolvable:$true] %s874
          %880 = dma.vmem_to_hbm [thread:$0]  %s875, 512, %s873, %s862, 128, 256, 8
        $region86: #{tpu_custom_call.1} parent=73 // pred_fallthru
          _
      $region74: #{tpu_custom_call.1} parent=5 // pred_fallthru
        _
      %p881 = scmp.le.s32.totalorder 2, %s15
      // Predicated region
      $region87: #{tpu_custom_call.1} parent=5 // pred_check
        %p882 = pneg %p881
      $region88: #{tpu_custom_call.1} parent=5 // pred_check_branch
        %884 = sbr.rel (%p882) target = $region90
      $region89: #{tpu_custom_call.1} parent=5 // pred_region
        %s885 = ssub.s32 %s15, 2
        // Predicated region
        $region91: #{tpu_custom_call.1} parent=89 // pred_check
          %p886 = pneg %p154
        $region92: #{tpu_custom_call.1} parent=89 // pred_check_branch
          %888 = sbr.rel (%p886) target = $region94
        $region93: #{tpu_custom_call.1} parent=89 // pred_region
          %s889 = sand.u32 %s139, 1
          %s890 = scalar_lea.sflag [#allocation4], %s889
          %s891 = sand.u32 %s139, 1
          %s892 = smul.addr %s891, 32
          %s893 = scalar_lea.vmem [#allocation6], %s892
          %894 = dma.done %s890, 512
        $region94: #{tpu_custom_call.1} parent=89 // pred_fallthru
          _
      $region90: #{tpu_custom_call.1} parent=5 // pred_fallthru
        _
    $region6: #{tpu_custom_call.1} parent=1 // loop_footer
      %s19 = sadd.s32 1, %s15
    $region7: #{tpu_custom_call.1} parent=1 // loop_footer_branch
      %14 = sbr.rel target = $region3
    $region8: #{tpu_custom_call.1} parent=1 // loop_exit
      _
    %895 = vsyncpa [#allocation4], 1
    %s896 = scalar_lea.sflag [#allocation4], 1
    %897 = vsyncpa %s896, 1
    %898 = vsyncpa [#allocation5], 1
    %s899 = scalar_lea.sflag [#allocation5], 1
    %900 = vsyncpa %s899, 1

</llo_original>
